<compile_context>
chip_gen: v7x
topology: tpu7x:2x2x1
jax: 0.10.0
libtpu: 0.0.40
codegen_flags: <defaults>
</compile_context>

<pallas_src>
import jax
import jax.numpy as jnp
from jax.experimental import pallas as pl
from jax.experimental.pallas import tpu as pltpu

NUM_OPS = 4
TEMPERATURE = 0.05  # FasterAA default
LANES = 128
# 8192 * 128 * 4 B = 4 MiB per tile; ~16 MiB with double-buffered in+out.
MAX_TILE_ROWS = 8192
VMEM_LIMIT_BYTES = 32 << 20  # explicit: covers v5e's 16 MiB scoped default,
                             # stays well under v7x's 64 MiB physical VMEM.


# ---------------------------------------------------------------------------
# The fixed operation set (element-wise augmentations), used by the reference.
# ---------------------------------------------------------------------------
def _op0(x):  # identity
    return x


def _op1(x):  # brightness shift
    return jnp.clip(x + 0.1, 0.0, 1.0)


def _op2(x):  # contrast
    return jnp.clip((x - 0.5) * 1.5 + 0.5, 0.0, 1.0)


def _op3(x):  # invert
    return 1.0 - x


_OPS = (_op0, _op1, _op2, _op3)


# ---------------------------------------------------------------------------
# Kernel
# ---------------------------------------------------------------------------
def subpolicy_kernel(c_ref, x_ref, o_ref):
    """c_ref: SMEM (7,) precomputed scalar combos; x_ref/o_ref: VMEM tiles.

    combos = [w0 - w3, w3, w1, 0.1*w1, 1.5*w2, -0.25*w2, w2]
      out = (w0-w3)*x + w3
            + clip(w1*x + 0.1*w1,      0, w1)
            + clip(1.5*w2*x - 0.25*w2, 0, w2)
    (weights are softmax outputs, i.e. >= 0, so folding them into the clip
     bounds is exact.)
    """
    # Read the SMEM scalars once up front (single sld each, single broadcast).
    c_lin = c_ref[0]      # w0 - w3
    c_const = c_ref[1]    # w3
    c_bri = c_ref[2]      # w1 (brightness slope and clip upper bound)
    c_bri_off = c_ref[3]  # 0.1 * w1
    c_con_m = c_ref[4]    # 1.5 * w2
    c_con_off = c_ref[5]  # -0.25 * w2
    c_con = c_ref[6]      # w2 (contrast clip upper bound)

    x = x_ref[...].astype(jnp.float32)
    acc = c_lin * x + c_const
    acc = acc + jnp.clip(c_bri * x + c_bri_off, 0.0, c_bri)
    acc = acc + jnp.clip(c_con_m * x + c_con_off, 0.0, c_con)
    o_ref[...] = acc.astype(o_ref.dtype)


# ---------------------------------------------------------------------------
# Wrapper
# ---------------------------------------------------------------------------
def subpolicy_stage(x, raw_weights, temperature=TEMPERATURE):
    """x: (B, C, H, W) float32 NCHW. raw_weights: (NUM_OPS,) float32."""
    B, C, H, W = x.shape
    total = B * C * H * W

    # softmax(weights / temperature) -- scalar glue, stays in plain JAX.
    w = jax.nn.softmax(raw_weights / temperature, axis=0).astype(jnp.float32)
    # Precompute folded scalar combos (identity+invert collapsed, per-op
    # weights folded into the clip bounds).
    combos = jnp.stack(
        [
            w[0] - w[3],   # linear slope
            w[3],          # constant
            w[1],          # brightness slope / clip hi
            0.1 * w[1],    # brightness offset
            1.5 * w[2],    # contrast slope
            -0.25 * w[2],  # contrast offset
            w[2],          # contrast clip hi
        ]
    ).astype(jnp.float32)

    # Lane-dense slab: (rows, 128).  Fast path (common case, incl. the test
    # shape): total is a multiple of 128 -> no pad, no output slice, zero
    # extra HBM passes.  Fallback pads only the sub-128 tail.
    xf = x.reshape(-1)
    padded = total % LANES != 0
    if padded:
        xf = jnp.pad(xf, (0, LANES - total % LANES))
    rows = xf.shape[0] // LANES
    x2d = xf.reshape(rows, LANES)

    if rows <= MAX_TILE_ROWS:
        # Single block equal to the full array dims -- always a legal block.
        tile_rows = rows
    else:
        # Multiple of 8 (sublane-aligned); Pallas masks the ragged last block,
        # which is safe because the op is purely elementwise.
        tile_rows = MAX_TILE_ROWS
    grid = (pl.cdiv(rows, tile_rows),)

    out2d = pl.pallas_call(
        subpolicy_kernel,
        out_shape=jax.ShapeDtypeStruct((rows, LANES), x.dtype),
        grid=grid,
        in_specs=[
            # K-sized weight-combo vector, whole array in SMEM every step.
            pl.BlockSpec(memory_space=pltpu.MemorySpace.SMEM),
            # Lane-dense image slab, tiled along rows (auto double-buffered).
            pl.BlockSpec((tile_rows, LANES), lambda i: (i, 0)),
        ],
        out_specs=pl.BlockSpec((tile_rows, LANES), lambda i: (i, 0)),
        compiler_params=pltpu.CompilerParams(
            dimension_semantics=("parallel",),  # shard across TCs on v7x
            vmem_limit_bytes=VMEM_LIMIT_BYTES,
        ),
    )(combos, x2d)

    out_flat = out2d.reshape(-1)
    if padded:
        out_flat = out_flat[:total]
    return out_flat.reshape(B, C, H, W)


# ---------------------------------------------------------------------------
# Pure-JAX reference mirroring the PyTorch training-mode forward.
# ---------------------------------------------------------------------------
def subpolicy_stage_ref(x, raw_weights, temperature=TEMPERATURE):
    weights = jax.nn.softmax(raw_weights / temperature, axis=0)
    stacked = jnp.stack([op(x) for op in _OPS])                # (K, B, C, H, W)
    return (stacked * weights.reshape(-1, 1, 1, 1, 1)).sum(0)  # (B, C, H, W)


if __name__ == "__main__":
    key = jax.random.PRNGKey(0)
    x = jax.random.uniform(key, (2, 4, 16, 16), dtype=jnp.float32)

    # nn.Parameter(torch.ones(len(operations))) -> deterministic ones init
    raw_weights = jnp.ones((NUM_OPS,), dtype=jnp.float32)

    out = subpolicy_stage(x, raw_weights)
    out = jax.block_until_ready(out)

    ref = subpolicy_stage_ref(x, raw_weights)
    assert out.shape == (2, 4, 16, 16)
    assert jnp.allclose(out, ref, atol=1e-5, rtol=1e-5), "mismatch vs reference"

    print("KERNEL_OK")
</pallas_src>

<mosaic_0001>
module attributes {stable_mosaic.version = 11 : i64} {
  func.func @subpolicy_kernel(%arg0: i32, %arg1: memref<7xf32, #tpu.memory_space<smem>>, %arg2: memref<16x128xf32, #tpu.memory_space<vmem>>, %arg3: memref<16x128xf32, #tpu.memory_space<vmem>>) attributes {dimension_semantics = [#tpu.dimension_semantics<parallel>], iteration_bounds = array<i64: 1>, scalar_prefetch = 0 : i64, scratch_operands = 0 : i64, tpu.core_type = #tpu.core_type<tc>, window_params = [{transform_indices = @transform_0, window_bounds = array<i64: 7>}, {transform_indices = @transform_1, window_bounds = array<i64: 16, 128>}, {transform_indices = @transform_2, window_bounds = array<i64: 16, 128>}]} {
    %c0 = arith.constant 0 : index
    %0 = memref.load %arg1[%c0] : memref<7xf32, #tpu.memory_space<smem>>
    %c1 = arith.constant 1 : index
    %1 = memref.load %arg1[%c1] : memref<7xf32, #tpu.memory_space<smem>>
    %c2 = arith.constant 2 : index
    %2 = memref.load %arg1[%c2] : memref<7xf32, #tpu.memory_space<smem>>
    %c3 = arith.constant 3 : index
    %3 = memref.load %arg1[%c3] : memref<7xf32, #tpu.memory_space<smem>>
    %c4 = arith.constant 4 : index
    %4 = memref.load %arg1[%c4] : memref<7xf32, #tpu.memory_space<smem>>
    %c5 = arith.constant 5 : index
    %5 = memref.load %arg1[%c5] : memref<7xf32, #tpu.memory_space<smem>>
    %c6 = arith.constant 6 : index
    %6 = memref.load %arg1[%c6] : memref<7xf32, #tpu.memory_space<smem>>
    %c0_0 = arith.constant 0 : index
    %c0_1 = arith.constant 0 : index
    %7 = vector.load %arg2[%c0_0, %c0_1] : memref<16x128xf32, #tpu.memory_space<vmem>>, vector<16x128xf32>
    %8 = vector.broadcast %0 : f32 to vector<16x128xf32>
    %9 = arith.mulf %8, %7 : vector<16x128xf32>
    %10 = vector.broadcast %1 : f32 to vector<16x128xf32>
    %11 = arith.addf %9, %10 : vector<16x128xf32>
    %12 = vector.broadcast %2 : f32 to vector<16x128xf32>
    %13 = arith.mulf %12, %7 : vector<16x128xf32>
    %14 = vector.broadcast %3 : f32 to vector<16x128xf32>
    %15 = arith.addf %13, %14 : vector<16x128xf32>
    %cst = arith.constant 0.000000e+00 : f32
    %16 = vector.broadcast %cst : f32 to vector<16x128xf32>
    %17 = arith.maximumf %16, %15 : vector<16x128xf32>
    %18 = vector.broadcast %2 : f32 to vector<16x128xf32>
    %19 = arith.minimumf %18, %17 : vector<16x128xf32>
    %20 = arith.addf %11, %19 : vector<16x128xf32>
    %21 = vector.broadcast %4 : f32 to vector<16x128xf32>
    %22 = arith.mulf %21, %7 : vector<16x128xf32>
    %23 = vector.broadcast %5 : f32 to vector<16x128xf32>
    %24 = arith.addf %22, %23 : vector<16x128xf32>
    %cst_2 = arith.constant 0.000000e+00 : f32
    %25 = vector.broadcast %cst_2 : f32 to vector<16x128xf32>
    %26 = arith.maximumf %25, %24 : vector<16x128xf32>
    %27 = vector.broadcast %6 : f32 to vector<16x128xf32>
    %28 = arith.minimumf %27, %26 : vector<16x128xf32>
    %29 = arith.addf %20, %28 : vector<16x128xf32>
    %c0_3 = arith.constant 0 : index
    %c0_4 = arith.constant 0 : index
    %30 = vector.load %arg3[%c0_3, %c0_4] : memref<16x128xf32, #tpu.memory_space<vmem>>, vector<16x128xf32>
    tpu.vector_store %arg3[%c0_3, %c0_4], %29 {strides = array<i32>} : memref<16x128xf32, #tpu.memory_space<vmem>>, vector<16x128xf32>,
    return
  }
  func.func @transform_0(%arg0: i32) -> i32 {
    %c0_i32 = arith.constant 0 : i32
    %c0_i32_0 = arith.constant 0 : i32
    return %c0_i32 : i32
  }
  func.func @transform_1(%arg0: i32) -> (i32, i32) {
    %c0_i32 = arith.constant 0 : i32
    %c0_i32_0 = arith.constant 0 : i32
    return %arg0, %c0_i32 : i32, i32
  }
  func.func @transform_2(%arg0: i32) -> (i32, i32) {
    %c0_i32 = arith.constant 0 : i32
    %c0_i32_0 = arith.constant 0 : i32
    return %arg0, %c0_i32 : i32, i32
  }
}

</mosaic_0001>

<llo_original>
// kernel: tpu_custom_call.1
$region0: #{tpu_custom_call.1}
  #allocation0 [shape = 'u32[]', space=smem, size = 0x4, offset = 0x4, fixed_abs, tag = 'smem constant byte address 0x4 - core index']
  #allocation1 [shape = 'u32[144,128]{1,0:T(1,128)}', space=vmem, size = 0x12000, scoped, tag = 'internal scratch']
  %s0 = inlined_call_operand.hbm [shape: f32[7], index: 0, kind: input, shape index: {}]
  %s1 = inlined_call_operand.hbm [shape: f32[16,128], index: 1, kind: input, shape index: {}]
  %s2 = inlined_call_operand.hbm [shape: f32[16,128], index: 2, kind: output, shape index: {}]
  %s3 = sld [smem:[#allocation0]]
  $region26: #{tpu_custom_call.1} parent=0
    _
  %s5 = ssub.s32 1, %s3
  %s6 = scalar_select 0, %s5, %s3
  $region1: #{tpu_custom_call.1} parent=0
    #allocation2 [shape = 'u8[512]{0}', space=smem, size = 0x200, scoped, tag = 'input window, operand 0, single buffered']
    #allocation3 [shape = 's32[1]{0}', space=sflag, size = 0x4, scoped, tag = 'scoped memory for tpu_custom_call.1']
    #allocation4 [shape = 's32[1]{0}', space=sflag, size = 0x4, scoped, tag = 'scoped memory for tpu_custom_call.1']
    #allocation5 [shape = 's32[1]{0}', space=sflag, size = 0x4, scoped, tag = 'scoped memory for tpu_custom_call.1']
    #allocation6 [shape = 'u8[8192]{0}', space=vmem, size = 0x2000, scoped, tag = 'input window, operand 1, single buffered']
    #allocation7 [shape = 'u8[8192]{0}', space=vmem, size = 0x2000, scoped, tag = 'output window, operand 0, single buffered']
    %7 = vsyncpa [#allocation5], 0
    %8 = vsyncpa [#allocation3], 0
    %9 = vsyncpa [#allocation4], 0
    // Predicated region
    $region2: #{tpu_custom_call.1} parent=1 // pred_check
      _
    $region3: #{tpu_custom_call.1} parent=1 // pred_check_branch
      %11 = sbr.rel (0) target = $region5
    $region4: #{tpu_custom_call.1} parent=1 // pred_region
      %s13 = ssub.s32 16, 16
      %14 = vsyncadd [#allocation5], %s13
      %17 = dma.hbm_to_smem %s0, 16, [#allocation2], [#allocation5]
    $region5: #{tpu_custom_call.1} parent=1 // pred_fallthru
      _
    // Predicated region
    $region6: #{tpu_custom_call.1} parent=1 // pred_check
      _
    $region7: #{tpu_custom_call.1} parent=1 // pred_check_branch
      %19 = sbr.rel (0) target = $region9
    $region8: #{tpu_custom_call.1} parent=1 // pred_region
      %s21 = ssub.s32 256, 256
      %22 = vsyncadd [#allocation3], %s21
      %s23 = sshll.u32 [#allocation6], 4
      %s24 = int_to_ptr.vmem [resolvable:$true] %s23
      %29 = dma.hbm_to_vmem [thread:$0]  %s1, 256, %s24, [#allocation3], 128, 128, 8
    $region9: #{tpu_custom_call.1} parent=1 // pred_fallthru
      _
    // Predicated region
    $region10: #{tpu_custom_call.1} parent=1 // pred_check
      _
    $region11: #{tpu_custom_call.1} parent=1 // pred_check_branch
      %31 = sbr.rel (0) target = $region13
    $region12: #{tpu_custom_call.1} parent=1 // pred_region
      %32 = dma.done [#allocation5], 16
    $region13: #{tpu_custom_call.1} parent=1 // pred_fallthru
      _
    // Predicated region
    $region14: #{tpu_custom_call.1} parent=1 // pred_check
      _
    $region15: #{tpu_custom_call.1} parent=1 // pred_check_branch
      %34 = sbr.rel (0) target = $region17
    $region16: #{tpu_custom_call.1} parent=1 // pred_region
      %35 = dma.done [#allocation3], 256
    $region17: #{tpu_custom_call.1} parent=1 // pred_fallthru
      _
    %36 = sfence
    %s37 = sld [smem:[#allocation2]]
    %s38 = sld [smem:[#allocation2 + $0x1]]
    %s39 = sld [smem:[#allocation2 + $0x2]]
    %s40 = sld [smem:[#allocation2 + $0x3]]
    %s41 = sld [smem:[#allocation2 + $0x4]]
    %s42 = sld [smem:[#allocation2 + $0x5]]
    %s43 = sld [smem:[#allocation2 + $0x6]]
    %v44 = vld [vmem:[#allocation6] sm:$0xff]
    %v45 = vld [vmem:[#allocation6 + $0x8] sm:$0xff]
    %v46 = vstv %s37
    %v47 = vmul.f32 %v46, %v44
    %v48 = vmul.f32 %v46, %v45
    %v49 = vstv %s38
    %v50 = vadd.f32 %v47, %v49
    %v51 = vadd.f32 %v48, %v49
    %v52 = vstv %s39
    %v53 = vmul.f32 %v52, %v44
    %v54 = vmul.f32 %v52, %v45
    %v55 = vstv %s40
    %v56 = vadd.f32 %v53, %v55
    %v57 = vadd.f32 %v54, %v55
    %v58 = vmax.f32 %v56, 0.0
    %v59 = vmax.f32 %v57, 0.0
    %v60 = vmin.f32 %v52, %v58
    %v61 = vmin.f32 %v52, %v59
    %v62 = vadd.f32 %v50, %v60
    %v63 = vadd.f32 %v51, %v61
    %v64 = vstv %s41
    %v65 = vmul.f32 %v64, %v44
    %v66 = vmul.f32 %v64, %v45
    %v67 = vstv %s42
    %v68 = vadd.f32 %v65, %v67
    %v69 = vadd.f32 %v66, %v67
    %v70 = vmax.f32 %v68, 0.0
    %v71 = vmax.f32 %v69, 0.0
    %v72 = vstv %s43
    %v73 = vmin.f32 %v72, %v70
    %v74 = vmin.f32 %v72, %v71
    %v75 = vadd.f32 %v62, %v73
    %v76 = vadd.f32 %v63, %v74
    %77 = vst [vmem:[#allocation7] sm:$0xff] %v75
    %78 = vst [vmem:[#allocation7 + $0x8] sm:$0xff] %v76
    // Predicated region
    $region18: #{tpu_custom_call.1} parent=1 // pred_check
      _
    $region19: #{tpu_custom_call.1} parent=1 // pred_check_branch
      %80 = sbr.rel (0) target = $region21
    $region20: #{tpu_custom_call.1} parent=1 // pred_region
      %s82 = ssub.s32 256, 256
      %83 = vsyncadd [#allocation4], %s82
      %s84 = sshll.u32 [#allocation7], 4
      %s85 = int_to_ptr.vmem [resolvable:$true] %s84
      %90 = dma.vmem_to_hbm [thread:$0]  %s85, 256, %s2, [#allocation4], 128, 128, 8
    $region21: #{tpu_custom_call.1} parent=1 // pred_fallthru
      _
    // Predicated region
    $region22: #{tpu_custom_call.1} parent=1 // pred_check
      _
    $region23: #{tpu_custom_call.1} parent=1 // pred_check_branch
      %92 = sbr.rel (0) target = $region25
    $region24: #{tpu_custom_call.1} parent=1 // pred_region
      %93 = dma.done [#allocation4], 256
    $region25: #{tpu_custom_call.1} parent=1 // pred_fallthru
      _
    %94 = vsyncpa [#allocation3], 1
    %95 = vsyncpa [#allocation4], 1
    %96 = vsyncpa [#allocation5], 1

</llo_original>
